<compile_context>
chip_gen: v5e
topology: v5e:2x2
jax: 0.10.0
libtpu: 0.0.40
codegen_flags: <defaults>
</compile_context>

<pallas_src>
import jax
import jax.numpy as jnp
from jax.experimental import pallas as pl
from jax.experimental.pallas import tpu as pltpu


def _round_up(x, m):
    return (x + m - 1) // m * m


def _make_lstm_kernel(t_chunk, rem, hp, unroll):
    """Recurrence kernel closed over static sizes.

    Refs:
      xproj_ref : (T, TB, 4*Hp) bf16  precomputed (scaled) x@W_ih^T + bias chunk
      whh_ref   : (Hp, 4*Hp)    bf16  (scaled) W_hh^T, grid-resident
      h_out_ref : (TB, Hp)      bf16  output-resident h carry / final hidden
      c_out_ref : (TB, Hp)      f32   output-resident c carry / final cell
    """

    def run_steps(n_steps, xproj_ref, whh_ref, h_ref, c_ref):
        def body(tt, carry):
            h_prev, c_prev = carry                                 # bf16, f32
            # Only the recurrent projection sits on the serial path.
            gates = xproj_ref[tt].astype(jnp.float32) + jnp.dot(
                h_prev, whh_ref[...], preferred_element_type=jnp.float32)
            # 0.5 pre-scale for i/f/o already folded into the weights/bias:
            # sigmoid(z) = 0.5*tanh(0.5*z) + 0.5  ->  0.5*tanh(gates) + 0.5.
            tg = jnp.tanh(gates)                 # one lane-dense EUP slab (TB,4Hp)
            i_g = 0.5 * tg[:, 0 * hp:1 * hp] + 0.5
            f_g = 0.5 * tg[:, 1 * hp:2 * hp] + 0.5
            g_g = tg[:, 2 * hp:3 * hp]
            o_g = 0.5 * tg[:, 3 * hp:4 * hp] + 0.5
            c_new = f_g * c_prev + i_g * g_g
            h_new = (o_g * jnp.tanh(c_new)).astype(h_ref.dtype)    # bf16 carry
            return h_new, c_new

        h_fin, c_fin = jax.lax.fori_loop(
            0, n_steps, body, (h_ref[...], c_ref[...]), unroll=unroll)
        h_ref[...] = h_fin
        c_ref[...] = c_fin

    def kernel(xproj_ref, whh_ref, h_out_ref, c_out_ref):
        t = pl.program_id(1)

        @pl.when(t == 0)
        def _():
            h_out_ref[...] = jnp.zeros_like(h_out_ref)
            c_out_ref[...] = jnp.zeros_like(c_out_ref)

        if rem == 0:
            # Common case: no tail masking emitted at all.
            run_steps(t_chunk, xproj_ref, whh_ref, h_out_ref, c_out_ref)
        else:
            nt = pl.num_programs(1)

            @pl.when(t < nt - 1)
            def _():
                run_steps(t_chunk, xproj_ref, whh_ref, h_out_ref, c_out_ref)

            @pl.when(t == nt - 1)
            def _():
                # Last chunk: static shorter trip count; padded steps never read.
                run_steps(rem, xproj_ref, whh_ref, h_out_ref, c_out_ref)

    return kernel


def encoder_lstm_forward(source, params, *, t_chunk=32,
                         compute_dtype=jnp.bfloat16):
    """source: (B, S) int32 token ids. Returns (hidden, cell), each (1, B, H)."""
    emb_table = params["embedding"]                # (V, E)
    w_ih_t = params["w_ih_t"]                      # (E, 4H)
    w_hh_t = params["w_hh_t"]                      # (H, 4H)
    bias = params["b_ih"][0] + params["b_hh"][0]   # (4H,) folded biases

    B, S = source.shape
    E = emb_table.shape[1]
    H = w_hh_t.shape[0]

    Hp = _round_up(H, 128)     # lane alignment (per gate)

    # --- batch tiling: TB matched to MXU height, nb >= 2 when B is large.
    Bp0 = _round_up(B, 8)
    if Bp0 <= 16:
        TB = Bp0                                   # single full-width tile
    else:
        TB = min(256, _round_up((Bp0 + 1) // 2, 16))
    Bp = _round_up(Bp0, TB)
    nb = Bp // TB

    # --- time chunk under a v7x-safe VMEM budget.
    T = max(1, min(t_chunk, S))

    def _vmem_need(t_):
        xproj_b = 2 * t_ * TB * 4 * Hp * 2      # bf16 chunk, double-buffered
        whh_b = 2 * Hp * 4 * Hp * 2             # resident W_hh^T (conservative x2)
        out_b = 2 * TB * Hp * (2 + 4)           # resident h (bf16) + c (f32)
        return xproj_b + whh_b + out_b

    VMEM_BUDGET = 48 * 1024 * 1024              # leaves headroom under v7x 64 MiB
    while T > 1 and _vmem_need(T) > VMEM_BUDGET:
        T //= 2
    nc = pl.cdiv(S, T)
    Sp = nc * T
    rem = S % T                                 # 0 -> no tail code emitted

    # --- weights: gate-wise pad H->Hp, fold 0.5 sigmoid pre-scale into i/f/o.
    gate_scale = jnp.array([0.5, 0.5, 1.0, 0.5], jnp.float32)   # (i, f, g, o)
    w_ih_p = jnp.pad(w_ih_t.reshape(E, 4, H), ((0, 0), (0, 0), (0, Hp - H)))
    w_ih_p = (w_ih_p * gate_scale[None, :, None]).reshape(E, 4 * Hp)
    w_ih_p = w_ih_p.astype(compute_dtype)
    bias_p = jnp.pad(bias.reshape(4, H), ((0, 0), (0, Hp - H)))
    bias_p = (bias_p * gate_scale[:, None]).reshape(4 * Hp)     # stays f32
    w_hh_p = jnp.pad(w_hh_t.reshape(H, 4, H), ((0, Hp - H), (0, 0), (0, Hp - H)))
    w_hh_p = (w_hh_p * gate_scale[None, :, None]).reshape(Hp, 4 * Hp)
    w_hh_p = w_hh_p.astype(compute_dtype)

    # --- glue (plain JAX): pre-padded time-major gather + ONE big input matmul.
    src_p = jnp.pad(source, ((0, Bp - B), (0, Sp - S)))          # token 0 pad
    emb_tm = jnp.take(emb_table, src_p.T, axis=0).astype(compute_dtype)  # (Sp,Bp,E)
    xproj = jnp.dot(emb_tm.reshape(Sp * Bp, E), w_ih_p,
                    preferred_element_type=jnp.float32) + bias_p
    xproj = xproj.astype(compute_dtype).reshape(Sp, Bp, 4 * Hp)  # bf16 HBM stream

    unroll = True if TB * 4 * Hp <= 8192 else 4                  # cap vreg pressure
    kernel = _make_lstm_kernel(T, rem, Hp, unroll)

    grid_spec = pltpu.PrefetchScalarGridSpec(
        num_scalar_prefetch=0,
        grid=(nb, nc),
        in_specs=[
            pl.BlockSpec((T, TB, 4 * Hp), lambda b, t: (t, b, 0)),  # xproj chunk
            pl.BlockSpec((Hp, 4 * Hp), lambda b, t: (0, 0)),        # W_hh^T resident
        ],
        out_specs=[
            pl.BlockSpec((TB, Hp), lambda b, t: (b, 0)),            # h carry/out
            pl.BlockSpec((TB, Hp), lambda b, t: (b, 0)),            # c carry/out
        ],
    )

    vmem_limit = int(min(max(2 * _vmem_need(T), 32 << 20), 56 << 20))

    h_pad, c_pad = pl.pallas_call(
        kernel,
        out_shape=(
            jax.ShapeDtypeStruct((Bp, Hp), compute_dtype),   # h (bf16 carry)
            jax.ShapeDtypeStruct((Bp, Hp), jnp.float32),     # c (f32 carry)
        ),
        grid_spec=grid_spec,
        compiler_params=pltpu.CompilerParams(
            # Batch tiles are independent (v7x dual-TC); time is the recurrence.
            dimension_semantics=("parallel", "arbitrary"),
            vmem_limit_bytes=vmem_limit,
        ),
    )(xproj, w_hh_p)

    hidden = h_pad[:B, :H].astype(jnp.float32)[None]   # (n_layers=1, B, H)
    cell = c_pad[:B, :H][None]
    return hidden, cell


def init_params(key, input_dim, emb_dim, hidden_dim):
    """Deterministic parameter init mimicking the module's shapes."""
    k_emb, k_wih, k_whh, k_bih, k_bhh = jax.random.split(key, 5)
    bound = 1.0 / jnp.sqrt(hidden_dim)
    return {
        "embedding": jax.random.normal(k_emb, (input_dim, emb_dim), jnp.float32),
        # stored pre-transposed relative to PyTorch's (4H, E)/(4H, H)
        "w_ih_t": jax.random.uniform(k_wih, (emb_dim, 4 * hidden_dim), jnp.float32,
                                     -bound, bound),
        "w_hh_t": jax.random.uniform(k_whh, (hidden_dim, 4 * hidden_dim), jnp.float32,
                                     -bound, bound),
        "b_ih": jax.random.uniform(k_bih, (1, 4 * hidden_dim), jnp.float32, -bound, bound),
        "b_hh": jax.random.uniform(k_bhh, (1, 4 * hidden_dim), jnp.float32, -bound, bound),
    }


def _reference_forward(source, params):
    """Pure-JAX f32 reference (lax.scan) mirroring nn.LSTM, gate order i,f,g,o."""
    emb = jnp.take(params["embedding"], source, axis=0)       # (B, S, E)
    B = emb.shape[0]
    H = params["w_hh_t"].shape[0]

    def step(carry, x_t):
        h, c = carry
        gates = (x_t @ params["w_ih_t"] + h @ params["w_hh_t"]
                 + params["b_ih"][0] + params["b_hh"][0])
        i = jax.nn.sigmoid(gates[:, 0 * H:1 * H])
        f = jax.nn.sigmoid(gates[:, 1 * H:2 * H])
        g = jnp.tanh(gates[:, 2 * H:3 * H])
        o = jax.nn.sigmoid(gates[:, 3 * H:4 * H])
        c_new = f * c + i * g
        h_new = o * jnp.tanh(c_new)
        return (h_new, c_new), None

    init = (jnp.zeros((B, H), jnp.float32), jnp.zeros((B, H), jnp.float32))
    (h_fin, c_fin), _ = jax.lax.scan(step, init, jnp.transpose(emb, (1, 0, 2)))
    return h_fin[None], c_fin[None]


if __name__ == "__main__":
    # Small shapes consistent with the module: vocab=64, emb=16, hidden=32,
    # batch=2, seq=8, n_layers=1.
    INPUT_DIM, EMB_DIM, HIDDEN_DIM = 64, 16, 32
    B, S = 2, 8

    key = jax.random.PRNGKey(0)
    k_tok, k_par = jax.random.split(key)
    params = init_params(k_par, INPUT_DIM, EMB_DIM, HIDDEN_DIM)
    source = jax.random.randint(k_tok, (B, S), 0, INPUT_DIM, dtype=jnp.int32)

    forward = jax.jit(encoder_lstm_forward)
    hidden, cell = forward(source, params)
    jax.block_until_ready((hidden, cell))

    # Sanity-check against pure-f32 JAX reference (bf16 MXU inputs + bf16 h carry
    # + bf16 xproj stream => lenient tolerance).
    h_ref, c_ref = _reference_forward(source, params)
    assert hidden.shape == (1, B, HIDDEN_DIM) and cell.shape == (1, B, HIDDEN_DIM)
    assert jnp.allclose(hidden, h_ref, atol=3e-2, rtol=3e-2)
    assert jnp.allclose(cell, c_ref, atol=3e-2, rtol=3e-2)

    print("KERNEL_OK")
</pallas_src>

<mosaic_0001>
module attributes {stable_mosaic.version = 11 : i64} {
  func.func @kernel(%arg0: i32, %arg1: i32, %arg2: memref<8x8x512xbf16, #tpu.memory_space<vmem>>, %arg3: memref<128x512xbf16, #tpu.memory_space<vmem>>, %arg4: memref<8x128xbf16, #tpu.memory_space<vmem>>, %arg5: memref<8x128xf32, #tpu.memory_space<vmem>>) attributes {dimension_semantics = [#tpu.dimension_semantics<parallel>, #tpu.dimension_semantics<arbitrary>], iteration_bounds = array<i64: 1, 1>, scalar_prefetch = 0 : i64, scratch_operands = 0 : i64, tpu.core_type = #tpu.core_type<tc>, window_params = [{transform_indices = @transform_0, window_bounds = array<i64: 8, 8, 512>}, {pipeline_mode = #tpu.pipeline_mode<synchronous>, transform_indices = @transform_1, window_bounds = array<i64: 128, 512>}, {transform_indices = @transform_2, window_bounds = array<i64: 8, 128>}, {transform_indices = @transform_3, window_bounds = array<i64: 8, 128>}]} {
    %c0_i32 = arith.constant 0 : i32
    %0 = arith.cmpi eq, %arg1, %c0_i32 : i32
    %1 = arith.extui %0 : i1 to i32
    %c0_i32_0 = arith.constant 0 : i32
    %2 = arith.cmpi ne, %1, %c0_i32_0 : i32
    scf.if %2 {
      %cst_96 = arith.constant 0.000000e+00 : bf16
      %247 = vector.broadcast %cst_96 : bf16 to vector<8x128xbf16>
      %c0_97 = arith.constant 0 : index
      %c0_98 = arith.constant 0 : index
      %248 = vector.load %arg4[%c0_97, %c0_98] : memref<8x128xbf16, #tpu.memory_space<vmem>>, vector<8x128xbf16>
      tpu.vector_store %arg4[%c0_97, %c0_98], %247 {strides = array<i32>} : memref<8x128xbf16, #tpu.memory_space<vmem>>, vector<8x128xbf16>,
      %cst_99 = arith.constant 0.000000e+00 : f32
      %249 = vector.broadcast %cst_99 : f32 to vector<8x128xf32>
      %c0_100 = arith.constant 0 : index
      %c0_101 = arith.constant 0 : index
      %250 = vector.load %arg5[%c0_100, %c0_101] : memref<8x128xf32, #tpu.memory_space<vmem>>, vector<8x128xf32>
      tpu.vector_store %arg5[%c0_100, %c0_101], %249 {strides = array<i32>} : memref<8x128xf32, #tpu.memory_space<vmem>>, vector<8x128xf32>,
    } else {
    }
    %c0 = arith.constant 0 : index
    %c0_1 = arith.constant 0 : index
    %3 = vector.load %arg4[%c0, %c0_1] : memref<8x128xbf16, #tpu.memory_space<vmem>>, vector<8x128xbf16>
    %c0_2 = arith.constant 0 : index
    %c0_3 = arith.constant 0 : index
    %4 = vector.load %arg5[%c0_2, %c0_3] : memref<8x128xf32, #tpu.memory_space<vmem>>, vector<8x128xf32>
    %c0_i32_4 = arith.constant 0 : i32
    %5 = arith.index_cast %c0_i32_4 : i32 to index
    %c0_5 = arith.constant 0 : index
    %c0_6 = arith.constant 0 : index
    %6 = vector.load %arg2[%5, %c0_5, %c0_6] : memref<8x8x512xbf16, #tpu.memory_space<vmem>>, vector<1x8x512xbf16>
    %7 = vector.shape_cast %6 : vector<1x8x512xbf16> to vector<8x512xbf16>
    %8 = arith.extf %7 : vector<8x512xbf16> to vector<8x512xf32>
    %c0_7 = arith.constant 0 : index
    %c0_8 = arith.constant 0 : index
    %9 = vector.load %arg3[%c0_7, %c0_8] : memref<128x512xbf16, #tpu.memory_space<vmem>>, vector<128x512xbf16>
    %cst = arith.constant dense<0.000000e+00> : vector<8x512xf32>
    %10 = tpu.matmul %3, %9, %cst {dimension_numbers = #tpu.dot_dimension_numbers<[1], [0], [0], [1], [0, 0, 1, 1], [], []>} : vector<8x128xbf16>, vector<128x512xbf16>, vector<8x512xf32> -> vector<8x512xf32>
    %11 = arith.addf %8, %10 : vector<8x512xf32>
    %12 = math.tanh %11 : vector<8x512xf32>
    %13 = vector.extract_strided_slice %12 {offsets = [0, 0], sizes = [8, 128], strides = [1, 1]} : vector<8x512xf32> to vector<8x128xf32>
    %cst_9 = arith.constant 5.000000e-01 : f32
    %14 = vector.broadcast %cst_9 : f32 to vector<8x128xf32>
    %15 = arith.mulf %14, %13 : vector<8x128xf32>
    %cst_10 = arith.constant 5.000000e-01 : f32
    %16 = vector.broadcast %cst_10 : f32 to vector<8x128xf32>
    %17 = arith.addf %15, %16 : vector<8x128xf32>
    %18 = vector.extract_strided_slice %12 {offsets = [0, 128], sizes = [8, 128], strides = [1, 1]} : vector<8x512xf32> to vector<8x128xf32>
    %cst_11 = arith.constant 5.000000e-01 : f32
    %19 = vector.broadcast %cst_11 : f32 to vector<8x128xf32>
    %20 = arith.mulf %19, %18 : vector<8x128xf32>
    %cst_12 = arith.constant 5.000000e-01 : f32
    %21 = vector.broadcast %cst_12 : f32 to vector<8x128xf32>
    %22 = arith.addf %20, %21 : vector<8x128xf32>
    %23 = vector.extract_strided_slice %12 {offsets = [0, 256], sizes = [8, 128], strides = [1, 1]} : vector<8x512xf32> to vector<8x128xf32>
    %24 = vector.extract_strided_slice %12 {offsets = [0, 384], sizes = [8, 128], strides = [1, 1]} : vector<8x512xf32> to vector<8x128xf32>
    %cst_13 = arith.constant 5.000000e-01 : f32
    %25 = vector.broadcast %cst_13 : f32 to vector<8x128xf32>
    %26 = arith.mulf %25, %24 : vector<8x128xf32>
    %cst_14 = arith.constant 5.000000e-01 : f32
    %27 = vector.broadcast %cst_14 : f32 to vector<8x128xf32>
    %28 = arith.addf %26, %27 : vector<8x128xf32>
    %29 = arith.mulf %22, %4 : vector<8x128xf32>
    %30 = arith.mulf %17, %23 : vector<8x128xf32>
    %31 = arith.addf %29, %30 : vector<8x128xf32>
    %32 = math.tanh %31 : vector<8x128xf32>
    %33 = arith.mulf %28, %32 : vector<8x128xf32>
    %34 = arith.truncf %33 : vector<8x128xf32> to vector<8x128xbf16>
    %c1_i32 = arith.constant 1 : i32
    %35 = arith.index_cast %c1_i32 : i32 to index
    %c0_15 = arith.constant 0 : index
    %c0_16 = arith.constant 0 : index
    %36 = vector.load %arg2[%35, %c0_15, %c0_16] : memref<8x8x512xbf16, #tpu.memory_space<vmem>>, vector<1x8x512xbf16>
    %37 = vector.shape_cast %36 : vector<1x8x512xbf16> to vector<8x512xbf16>
    %38 = arith.extf %37 : vector<8x512xbf16> to vector<8x512xf32>
    %c0_17 = arith.constant 0 : index
    %c0_18 = arith.constant 0 : index
    %39 = vector.load %arg3[%c0_17, %c0_18] : memref<128x512xbf16, #tpu.memory_space<vmem>>, vector<128x512xbf16>
    %cst_19 = arith.constant dense<0.000000e+00> : vector<8x512xf32>
    %40 = tpu.matmul %34, %39, %cst_19 {dimension_numbers = #tpu.dot_dimension_numbers<[1], [0], [0], [1], [0, 0, 1, 1], [], []>} : vector<8x128xbf16>, vector<128x512xbf16>, vector<8x512xf32> -> vector<8x512xf32>
    %41 = arith.addf %38, %40 : vector<8x512xf32>
    %42 = math.tanh %41 : vector<8x512xf32>
    %43 = vector.extract_strided_slice %42 {offsets = [0, 0], sizes = [8, 128], strides = [1, 1]} : vector<8x512xf32> to vector<8x128xf32>
    %cst_20 = arith.constant 5.000000e-01 : f32
    %44 = vector.broadcast %cst_20 : f32 to vector<8x128xf32>
    %45 = arith.mulf %44, %43 : vector<8x128xf32>
    %cst_21 = arith.constant 5.000000e-01 : f32
    %46 = vector.broadcast %cst_21 : f32 to vector<8x128xf32>
    %47 = arith.addf %45, %46 : vector<8x128xf32>
    %48 = vector.extract_strided_slice %42 {offsets = [0, 128], sizes = [8, 128], strides = [1, 1]} : vector<8x512xf32> to vector<8x128xf32>
    %cst_22 = arith.constant 5.000000e-01 : f32
    %49 = vector.broadcast %cst_22 : f32 to vector<8x128xf32>
    %50 = arith.mulf %49, %48 : vector<8x128xf32>
    %cst_23 = arith.constant 5.000000e-01 : f32
    %51 = vector.broadcast %cst_23 : f32 to vector<8x128xf32>
    %52 = arith.addf %50, %51 : vector<8x128xf32>
    %53 = vector.extract_strided_slice %42 {offsets = [0, 256], sizes = [8, 128], strides = [1, 1]} : vector<8x512xf32> to vector<8x128xf32>
    %54 = vector.extract_strided_slice %42 {offsets = [0, 384], sizes = [8, 128], strides = [1, 1]} : vector<8x512xf32> to vector<8x128xf32>
    %cst_24 = arith.constant 5.000000e-01 : f32
    %55 = vector.broadcast %cst_24 : f32 to vector<8x128xf32>
    %56 = arith.mulf %55, %54 : vector<8x128xf32>
    %cst_25 = arith.constant 5.000000e-01 : f32
    %57 = vector.broadcast %cst_25 : f32 to vector<8x128xf32>
    %58 = arith.addf %56, %57 : vector<8x128xf32>
    %59 = arith.mulf %52, %31 : vector<8x128xf32>
    %60 = arith.mulf %47, %53 : vector<8x128xf32>
    %61 = arith.addf %59, %60 : vector<8x128xf32>
    %62 = math.tanh %61 : vector<8x128xf32>
    %63 = arith.mulf %58, %62 : vector<8x128xf32>
    %64 = arith.truncf %63 : vector<8x128xf32> to vector<8x128xbf16>
    %c2_i32 = arith.constant 2 : i32
    %65 = arith.index_cast %c2_i32 : i32 to index
    %c0_26 = arith.constant 0 : index
    %c0_27 = arith.constant 0 : index
    %66 = vector.load %arg2[%65, %c0_26, %c0_27] : memref<8x8x512xbf16, #tpu.memory_space<vmem>>, vector<1x8x512xbf16>
    %67 = vector.shape_cast %66 : vector<1x8x512xbf16> to vector<8x512xbf16>
    %68 = arith.extf %67 : vector<8x512xbf16> to vector<8x512xf32>
    %c0_28 = arith.constant 0 : index
    %c0_29 = arith.constant 0 : index
    %69 = vector.load %arg3[%c0_28, %c0_29] : memref<128x512xbf16, #tpu.memory_space<vmem>>, vector<128x512xbf16>
    %cst_30 = arith.constant dense<0.000000e+00> : vector<8x512xf32>
    %70 = tpu.matmul %64, %69, %cst_30 {dimension_numbers = #tpu.dot_dimension_numbers<[1], [0], [0], [1], [0, 0, 1, 1], [], []>} : vector<8x128xbf16>, vector<128x512xbf16>, vector<8x512xf32> -> vector<8x512xf32>
    %71 = arith.addf %68, %70 : vector<8x512xf32>
    %72 = math.tanh %71 : vector<8x512xf32>
    %73 = vector.extract_strided_slice %72 {offsets = [0, 0], sizes = [8, 128], strides = [1, 1]} : vector<8x512xf32> to vector<8x128xf32>
    %cst_31 = arith.constant 5.000000e-01 : f32
    %74 = vector.broadcast %cst_31 : f32 to vector<8x128xf32>
    %75 = arith.mulf %74, %73 : vector<8x128xf32>
    %cst_32 = arith.constant 5.000000e-01 : f32
    %76 = vector.broadcast %cst_32 : f32 to vector<8x128xf32>
    %77 = arith.addf %75, %76 : vector<8x128xf32>
    %78 = vector.extract_strided_slice %72 {offsets = [0, 128], sizes = [8, 128], strides = [1, 1]} : vector<8x512xf32> to vector<8x128xf32>
    %cst_33 = arith.constant 5.000000e-01 : f32
    %79 = vector.broadcast %cst_33 : f32 to vector<8x128xf32>
    %80 = arith.mulf %79, %78 : vector<8x128xf32>
    %cst_34 = arith.constant 5.000000e-01 : f32
    %81 = vector.broadcast %cst_34 : f32 to vector<8x128xf32>
    %82 = arith.addf %80, %81 : vector<8x128xf32>
    %83 = vector.extract_strided_slice %72 {offsets = [0, 256], sizes = [8, 128], strides = [1, 1]} : vector<8x512xf32> to vector<8x128xf32>
    %84 = vector.extract_strided_slice %72 {offsets = [0, 384], sizes = [8, 128], strides = [1, 1]} : vector<8x512xf32> to vector<8x128xf32>
    %cst_35 = arith.constant 5.000000e-01 : f32
    %85 = vector.broadcast %cst_35 : f32 to vector<8x128xf32>
    %86 = arith.mulf %85, %84 : vector<8x128xf32>
    %cst_36 = arith.constant 5.000000e-01 : f32
    %87 = vector.broadcast %cst_36 : f32 to vector<8x128xf32>
    %88 = arith.addf %86, %87 : vector<8x128xf32>
    %89 = arith.mulf %82, %61 : vector<8x128xf32>
    %90 = arith.mulf %77, %83 : vector<8x128xf32>
    %91 = arith.addf %89, %90 : vector<8x128xf32>
    %92 = math.tanh %91 : vector<8x128xf32>
    %93 = arith.mulf %88, %92 : vector<8x128xf32>
    %94 = arith.truncf %93 : vector<8x128xf32> to vector<8x128xbf16>
    %c3_i32 = arith.constant 3 : i32
    %95 = arith.index_cast %c3_i32 : i32 to index
    %c0_37 = arith.constant 0 : index
    %c0_38 = arith.constant 0 : index
    %96 = vector.load %arg2[%95, %c0_37, %c0_38] : memref<8x8x512xbf16, #tpu.memory_space<vmem>>, vector<1x8x512xbf16>
    %97 = vector.shape_cast %96 : vector<1x8x512xbf16> to vector<8x512xbf16>
    %98 = arith.extf %97 : vector<8x512xbf16> to vector<8x512xf32>
    %c0_39 = arith.constant 0 : index
    %c0_40 = arith.constant 0 : index
    %99 = vector.load %arg3[%c0_39, %c0_40] : memref<128x512xbf16, #tpu.memory_space<vmem>>, vector<128x512xbf16>
    %cst_41 = arith.constant dense<0.000000e+00> : vector<8x512xf32>
    %100 = tpu.matmul %94, %99, %cst_41 {dimension_numbers = #tpu.dot_dimension_numbers<[1], [0], [0], [1], [0, 0, 1, 1], [], []>} : vector<8x128xbf16>, vector<128x512xbf16>, vector<8x512xf32> -> vector<8x512xf32>
    %101 = arith.addf %98, %100 : vector<8x512xf32>
    %102 = math.tanh %101 : vector<8x512xf32>
    %103 = vector.extract_strided_slice %102 {offsets = [0, 0], sizes = [8, 128], strides = [1, 1]} : vector<8x512xf32> to vector<8x128xf32>
    %cst_42 = arith.constant 5.000000e-01 : f32
    %104 = vector.broadcast %cst_42 : f32 to vector<8x128xf32>
    %105 = arith.mulf %104, %103 : vector<8x128xf32>
    %cst_43 = arith.constant 5.000000e-01 : f32
    %106 = vector.broadcast %cst_43 : f32 to vector<8x128xf32>
    %107 = arith.addf %105, %106 : vector<8x128xf32>
    %108 = vector.extract_strided_slice %102 {offsets = [0, 128], sizes = [8, 128], strides = [1, 1]} : vector<8x512xf32> to vector<8x128xf32>
    %cst_44 = arith.constant 5.000000e-01 : f32
    %109 = vector.broadcast %cst_44 : f32 to vector<8x128xf32>
    %110 = arith.mulf %109, %108 : vector<8x128xf32>
    %cst_45 = arith.constant 5.000000e-01 : f32
    %111 = vector.broadcast %cst_45 : f32 to vector<8x128xf32>
    %112 = arith.addf %110, %111 : vector<8x128xf32>
    %113 = vector.extract_strided_slice %102 {offsets = [0, 256], sizes = [8, 128], strides = [1, 1]} : vector<8x512xf32> to vector<8x128xf32>
    %114 = vector.extract_strided_slice %102 {offsets = [0, 384], sizes = [8, 128], strides = [1, 1]} : vector<8x512xf32> to vector<8x128xf32>
    %cst_46 = arith.constant 5.000000e-01 : f32
    %115 = vector.broadcast %cst_46 : f32 to vector<8x128xf32>
    %116 = arith.mulf %115, %114 : vector<8x128xf32>
    %cst_47 = arith.constant 5.000000e-01 : f32
    %117 = vector.broadcast %cst_47 : f32 to vector<8x128xf32>
    %118 = arith.addf %116, %117 : vector<8x128xf32>
    %119 = arith.mulf %112, %91 : vector<8x128xf32>
    %120 = arith.mulf %107, %113 : vector<8x128xf32>
    %121 = arith.addf %119, %120 : vector<8x128xf32>
    %122 = math.tanh %121 : vector<8x128xf32>
    %123 = arith.mulf %118, %122 : vector<8x128xf32>
    %124 = arith.truncf %123 : vector<8x128xf32> to vector<8x128xbf16>
    %c4_i32 = arith.constant 4 : i32
    %125 = arith.index_cast %c4_i32 : i32 to index
    %c0_48 = arith.constant 0 : index
    %c0_49 = arith.constant 0 : index
    %126 = vector.load %arg2[%125, %c0_48, %c0_49] : memref<8x8x512xbf16, #tpu.memory_space<vmem>>, vector<1x8x512xbf16>
    %127 = vector.shape_cast %126 : vector<1x8x512xbf16> to vector<8x512xbf16>
    %128 = arith.extf %127 : vector<8x512xbf16> to vector<8x512xf32>
    %c0_50 = arith.constant 0 : index
    %c0_51 = arith.constant 0 : index
    %129 = vector.load %arg3[%c0_50, %c0_51] : memref<128x512xbf16, #tpu.memory_space<vmem>>, vector<128x512xbf16>
    %cst_52 = arith.constant dense<0.000000e+00> : vector<8x512xf32>
    %130 = tpu.matmul %124, %129, %cst_52 {dimension_numbers = #tpu.dot_dimension_numbers<[1], [0], [0], [1], [0, 0, 1, 1], [], []>} : vector<8x128xbf16>, vector<128x512xbf16>, vector<8x512xf32> -> vector<8x512xf32>
    %131 = arith.addf %128, %130 : vector<8x512xf32>
    %132 = math.tanh %131 : vector<8x512xf32>
    %133 = vector.extract_strided_slice %132 {offsets = [0, 0], sizes = [8, 128], strides = [1, 1]} : vector<8x512xf32> to vector<8x128xf32>
    %cst_53 = arith.constant 5.000000e-01 : f32
    %134 = vector.broadcast %cst_53 : f32 to vector<8x128xf32>
    %135 = arith.mulf %134, %133 : vector<8x128xf32>
    %cst_54 = arith.constant 5.000000e-01 : f32
    %136 = vector.broadcast %cst_54 : f32 to vector<8x128xf32>
    %137 = arith.addf %135, %136 : vector<8x128xf32>
    %138 = vector.extract_strided_slice %132 {offsets = [0, 128], sizes = [8, 128], strides = [1, 1]} : vector<8x512xf32> to vector<8x128xf32>
    %cst_55 = arith.constant 5.000000e-01 : f32
    %139 = vector.broadcast %cst_55 : f32 to vector<8x128xf32>
    %140 = arith.mulf %139, %138 : vector<8x128xf32>
    %cst_56 = arith.constant 5.000000e-01 : f32
    %141 = vector.broadcast %cst_56 : f32 to vector<8x128xf32>
    %142 = arith.addf %140, %141 : vector<8x128xf32>
    %143 = vector.extract_strided_slice %132 {offsets = [0, 256], sizes = [8, 128], strides = [1, 1]} : vector<8x512xf32> to vector<8x128xf32>
    %144 = vector.extract_strided_slice %132 {offsets = [0, 384], sizes = [8, 128], strides = [1, 1]} : vector<8x512xf32> to vector<8x128xf32>
    %cst_57 = arith.constant 5.000000e-01 : f32
    %145 = vector.broadcast %cst_57 : f32 to vector<8x128xf32>
    %146 = arith.mulf %145, %144 : vector<8x128xf32>
    %cst_58 = arith.constant 5.000000e-01 : f32
    %147 = vector.broadcast %cst_58 : f32 to vector<8x128xf32>
    %148 = arith.addf %146, %147 : vector<8x128xf32>
    %149 = arith.mulf %142, %121 : vector<8x128xf32>
    %150 = arith.mulf %137, %143 : vector<8x128xf32>
    %151 = arith.addf %149, %150 : vector<8x128xf32>
    %152 = math.tanh %151 : vector<8x128xf32>
    %153 = arith.mulf %148, %152 : vector<8x128xf32>
    %154 = arith.truncf %153 : vector<8x128xf32> to vector<8x128xbf16>
    %c5_i32 = arith.constant 5 : i32
    %155 = arith.index_cast %c5_i32 : i32 to index
    %c0_59 = arith.constant 0 : index
    %c0_60 = arith.constant 0 : index
    %156 = vector.load %arg2[%155, %c0_59, %c0_60] : memref<8x8x512xbf16, #tpu.memory_space<vmem>>, vector<1x8x512xbf16>
    %157 = vector.shape_cast %156 : vector<1x8x512xbf16> to vector<8x512xbf16>
    %158 = arith.extf %157 : vector<8x512xbf16> to vector<8x512xf32>
    %c0_61 = arith.constant 0 : index
    %c0_62 = arith.constant 0 : index
    %159 = vector.load %arg3[%c0_61, %c0_62] : memref<128x512xbf16, #tpu.memory_space<vmem>>, vector<128x512xbf16>
    %cst_63 = arith.constant dense<0.000000e+00> : vector<8x512xf32>
    %160 = tpu.matmul %154, %159, %cst_63 {dimension_numbers = #tpu.dot_dimension_numbers<[1], [0], [0], [1], [0, 0, 1, 1], [], []>} : vector<8x128xbf16>, vector<128x512xbf16>, vector<8x512xf32> -> vector<8x512xf32>
    %161 = arith.addf %158, %160 : vector<8x512xf32>
    %162 = math.tanh %161 : vector<8x512xf32>
    %163 = vector.extract_strided_slice %162 {offsets = [0, 0], sizes = [8, 128], strides = [1, 1]} : vector<8x512xf32> to vector<8x128xf32>
    %cst_64 = arith.constant 5.000000e-01 : f32
    %164 = vector.broadcast %cst_64 : f32 to vector<8x128xf32>
    %165 = arith.mulf %164, %163 : vector<8x128xf32>
    %cst_65 = arith.constant 5.000000e-01 : f32
    %166 = vector.broadcast %cst_65 : f32 to vector<8x128xf32>
    %167 = arith.addf %165, %166 : vector<8x128xf32>
    %168 = vector.extract_strided_slice %162 {offsets = [0, 128], sizes = [8, 128], strides = [1, 1]} : vector<8x512xf32> to vector<8x128xf32>
    %cst_66 = arith.constant 5.000000e-01 : f32
    %169 = vector.broadcast %cst_66 : f32 to vector<8x128xf32>
    %170 = arith.mulf %169, %168 : vector<8x128xf32>
    %cst_67 = arith.constant 5.000000e-01 : f32
    %171 = vector.broadcast %cst_67 : f32 to vector<8x128xf32>
    %172 = arith.addf %170, %171 : vector<8x128xf32>
    %173 = vector.extract_strided_slice %162 {offsets = [0, 256], sizes = [8, 128], strides = [1, 1]} : vector<8x512xf32> to vector<8x128xf32>
    %174 = vector.extract_strided_slice %162 {offsets = [0, 384], sizes = [8, 128], strides = [1, 1]} : vector<8x512xf32> to vector<8x128xf32>
    %cst_68 = arith.constant 5.000000e-01 : f32
    %175 = vector.broadcast %cst_68 : f32 to vector<8x128xf32>
    %176 = arith.mulf %175, %174 : vector<8x128xf32>
    %cst_69 = arith.constant 5.000000e-01 : f32
    %177 = vector.broadcast %cst_69 : f32 to vector<8x128xf32>
    %178 = arith.addf %176, %177 : vector<8x128xf32>
    %179 = arith.mulf %172, %151 : vector<8x128xf32>
    %180 = arith.mulf %167, %173 : vector<8x128xf32>
    %181 = arith.addf %179, %180 : vector<8x128xf32>
    %182 = math.tanh %181 : vector<8x128xf32>
    %183 = arith.mulf %178, %182 : vector<8x128xf32>
    %184 = arith.truncf %183 : vector<8x128xf32> to vector<8x128xbf16>
    %c6_i32 = arith.constant 6 : i32
    %185 = arith.index_cast %c6_i32 : i32 to index
    %c0_70 = arith.constant 0 : index
    %c0_71 = arith.constant 0 : index
    %186 = vector.load %arg2[%185, %c0_70, %c0_71] : memref<8x8x512xbf16, #tpu.memory_space<vmem>>, vector<1x8x512xbf16>
    %187 = vector.shape_cast %186 : vector<1x8x512xbf16> to vector<8x512xbf16>
    %188 = arith.extf %187 : vector<8x512xbf16> to vector<8x512xf32>
    %c0_72 = arith.constant 0 : index
    %c0_73 = arith.constant 0 : index
    %189 = vector.load %arg3[%c0_72, %c0_73] : memref<128x512xbf16, #tpu.memory_space<vmem>>, vector<128x512xbf16>
    %cst_74 = arith.constant dense<0.000000e+00> : vector<8x512xf32>
    %190 = tpu.matmul %184, %189, %cst_74 {dimension_numbers = #tpu.dot_dimension_numbers<[1], [0], [0], [1], [0, 0, 1, 1], [], []>} : vector<8x128xbf16>, vector<128x512xbf16>, vector<8x512xf32> -> vector<8x512xf32>
    %191 = arith.addf %188, %190 : vector<8x512xf32>
    %192 = math.tanh %191 : vector<8x512xf32>
    %193 = vector.extract_strided_slice %192 {offsets = [0, 0], sizes = [8, 128], strides = [1, 1]} : vector<8x512xf32> to vector<8x128xf32>
    %cst_75 = arith.constant 5.000000e-01 : f32
    %194 = vector.broadcast %cst_75 : f32 to vector<8x128xf32>
    %195 = arith.mulf %194, %193 : vector<8x128xf32>
    %cst_76 = arith.constant 5.000000e-01 : f32
    %196 = vector.broadcast %cst_76 : f32 to vector<8x128xf32>
    %197 = arith.addf %195, %196 : vector<8x128xf32>
    %198 = vector.extract_strided_slice %192 {offsets = [0, 128], sizes = [8, 128], strides = [1, 1]} : vector<8x512xf32> to vector<8x128xf32>
    %cst_77 = arith.constant 5.000000e-01 : f32
    %199 = vector.broadcast %cst_77 : f32 to vector<8x128xf32>
    %200 = arith.mulf %199, %198 : vector<8x128xf32>
    %cst_78 = arith.constant 5.000000e-01 : f32
    %201 = vector.broadcast %cst_78 : f32 to vector<8x128xf32>
    %202 = arith.addf %200, %201 : vector<8x128xf32>
    %203 = vector.extract_strided_slice %192 {offsets = [0, 256], sizes = [8, 128], strides = [1, 1]} : vector<8x512xf32> to vector<8x128xf32>
    %204 = vector.extract_strided_slice %192 {offsets = [0, 384], sizes = [8, 128], strides = [1, 1]} : vector<8x512xf32> to vector<8x128xf32>
    %cst_79 = arith.constant 5.000000e-01 : f32
    %205 = vector.broadcast %cst_79 : f32 to vector<8x128xf32>
    %206 = arith.mulf %205, %204 : vector<8x128xf32>
    %cst_80 = arith.constant 5.000000e-01 : f32
    %207 = vector.broadcast %cst_80 : f32 to vector<8x128xf32>
    %208 = arith.addf %206, %207 : vector<8x128xf32>
    %209 = arith.mulf %202, %181 : vector<8x128xf32>
    %210 = arith.mulf %197, %203 : vector<8x128xf32>
    %211 = arith.addf %209, %210 : vector<8x128xf32>
    %212 = math.tanh %211 : vector<8x128xf32>
    %213 = arith.mulf %208, %212 : vector<8x128xf32>
    %214 = arith.truncf %213 : vector<8x128xf32> to vector<8x128xbf16>
    %c7_i32 = arith.constant 7 : i32
    %215 = arith.index_cast %c7_i32 : i32 to index
    %c0_81 = arith.constant 0 : index
    %c0_82 = arith.constant 0 : index
    %216 = vector.load %arg2[%215, %c0_81, %c0_82] : memref<8x8x512xbf16, #tpu.memory_space<vmem>>, vector<1x8x512xbf16>
    %217 = vector.shape_cast %216 : vector<1x8x512xbf16> to vector<8x512xbf16>
    %218 = arith.extf %217 : vector<8x512xbf16> to vector<8x512xf32>
    %c0_83 = arith.constant 0 : index
    %c0_84 = arith.constant 0 : index
    %219 = vector.load %arg3[%c0_83, %c0_84] : memref<128x512xbf16, #tpu.memory_space<vmem>>, vector<128x512xbf16>
    %cst_85 = arith.constant dense<0.000000e+00> : vector<8x512xf32>
    %220 = tpu.matmul %214, %219, %cst_85 {dimension_numbers = #tpu.dot_dimension_numbers<[1], [0], [0], [1], [0, 0, 1, 1], [], []>} : vector<8x128xbf16>, vector<128x512xbf16>, vector<8x512xf32> -> vector<8x512xf32>
    %221 = arith.addf %218, %220 : vector<8x512xf32>
    %222 = math.tanh %221 : vector<8x512xf32>
    %223 = vector.extract_strided_slice %222 {offsets = [0, 0], sizes = [8, 128], strides = [1, 1]} : vector<8x512xf32> to vector<8x128xf32>
    %cst_86 = arith.constant 5.000000e-01 : f32
    %224 = vector.broadcast %cst_86 : f32 to vector<8x128xf32>
    %225 = arith.mulf %224, %223 : vector<8x128xf32>
    %cst_87 = arith.constant 5.000000e-01 : f32
    %226 = vector.broadcast %cst_87 : f32 to vector<8x128xf32>
    %227 = arith.addf %225, %226 : vector<8x128xf32>
    %228 = vector.extract_strided_slice %222 {offsets = [0, 128], sizes = [8, 128], strides = [1, 1]} : vector<8x512xf32> to vector<8x128xf32>
    %cst_88 = arith.constant 5.000000e-01 : f32
    %229 = vector.broadcast %cst_88 : f32 to vector<8x128xf32>
    %230 = arith.mulf %229, %228 : vector<8x128xf32>
    %cst_89 = arith.constant 5.000000e-01 : f32
    %231 = vector.broadcast %cst_89 : f32 to vector<8x128xf32>
    %232 = arith.addf %230, %231 : vector<8x128xf32>
    %233 = vector.extract_strided_slice %222 {offsets = [0, 256], sizes = [8, 128], strides = [1, 1]} : vector<8x512xf32> to vector<8x128xf32>
    %234 = vector.extract_strided_slice %222 {offsets = [0, 384], sizes = [8, 128], strides = [1, 1]} : vector<8x512xf32> to vector<8x128xf32>
    %cst_90 = arith.constant 5.000000e-01 : f32
    %235 = vector.broadcast %cst_90 : f32 to vector<8x128xf32>
    %236 = arith.mulf %235, %234 : vector<8x128xf32>
    %cst_91 = arith.constant 5.000000e-01 : f32
    %237 = vector.broadcast %cst_91 : f32 to vector<8x128xf32>
    %238 = arith.addf %236, %237 : vector<8x128xf32>
    %239 = arith.mulf %232, %211 : vector<8x128xf32>
    %240 = arith.mulf %227, %233 : vector<8x128xf32>
    %241 = arith.addf %239, %240 : vector<8x128xf32>
    %242 = math.tanh %241 : vector<8x128xf32>
    %243 = arith.mulf %238, %242 : vector<8x128xf32>
    %244 = arith.truncf %243 : vector<8x128xf32> to vector<8x128xbf16>
    %c8_i32 = arith.constant 8 : i32
    %c0_92 = arith.constant 0 : index
    %c0_93 = arith.constant 0 : index
    %245 = vector.load %arg4[%c0_92, %c0_93] : memref<8x128xbf16, #tpu.memory_space<vmem>>, vector<8x128xbf16>
    tpu.vector_store %arg4[%c0_92, %c0_93], %244 {strides = array<i32>} : memref<8x128xbf16, #tpu.memory_space<vmem>>, vector<8x128xbf16>,
    %c0_94 = arith.constant 0 : index
    %c0_95 = arith.constant 0 : index
    %246 = vector.load %arg5[%c0_94, %c0_95] : memref<8x128xf32, #tpu.memory_space<vmem>>, vector<8x128xf32>
    tpu.vector_store %arg5[%c0_94, %c0_95], %241 {strides = array<i32>} : memref<8x128xf32, #tpu.memory_space<vmem>>, vector<8x128xf32>,
    return
  }
  func.func @transform_0(%arg0: i32, %arg1: i32) -> (i32, i32, i32) {
    %c0_i32 = arith.constant 0 : i32
    %c0_i32_0 = arith.constant 0 : i32
    return %arg1, %arg0, %c0_i32 : i32, i32, i32
  }
  func.func @transform_1(%arg0: i32, %arg1: i32) -> (i32, i32) {
    %c0_i32 = arith.constant 0 : i32
    %c0_i32_0 = arith.constant 0 : i32
    %c0_i32_1 = arith.constant 0 : i32
    return %c0_i32, %c0_i32_0 : i32, i32
  }
  func.func @transform_2(%arg0: i32, %arg1: i32) -> (i32, i32) {
    %c0_i32 = arith.constant 0 : i32
    %c0_i32_0 = arith.constant 0 : i32
    return %arg0, %c0_i32 : i32, i32
  }
  func.func @transform_3(%arg0: i32, %arg1: i32) -> (i32, i32) {
    %c0_i32 = arith.constant 0 : i32
    %c0_i32_0 = arith.constant 0 : i32
    return %arg0, %c0_i32 : i32, i32
  }
}

</mosaic_0001>

<llo_original>
// kernel: encoder_lstm_forward.1
$region0: #{encoder_lstm_forward.1}
  #allocation0 [shape = 'u32[]', space=smem, size = 0x4, offset = 0x4, fixed_abs, tag = 'smem constant byte address 0x4 - core index']
  #allocation1 [shape = 'u32[72,128]{1,0:T(1,128)}', space=vmem, size = 0x9000, scoped, tag = 'internal scratch']
  %s0 = inlined_call_operand.vmem [shape: bf16[8,8,512], index: 0, kind: input, shape index: {}]
  %s1 = inlined_call_operand.vmem [shape: bf16[128,512], index: 1, kind: input, shape index: {}]
  %s2 = inlined_call_operand.vmem [shape: bf16[8,128], index: 2, kind: output, shape index: {0}]
  %s3 = inlined_call_operand.vmem [shape: f32[8,128], index: 3, kind: output, shape index: {1}]
  %4 = xla_tuple %s2, %s3
  %s5 = sld [smem:[#allocation0]]
  $region30: #{encoder_lstm_forward.1} parent=0
    _
  %s7 = ssub.s32 1, %s5
  %s8 = scalar_select 0, %s7, %s5
  // Predicated region
  $region2: #{encoder_lstm_forward.1} parent=0 // pred_check
    _
  $region3: #{encoder_lstm_forward.1} parent=0 // pred_check_branch
    %10 = sbr.rel (0) target = $region5
  $region4: #{encoder_lstm_forward.1} parent=0 // pred_region
    _
  $region5: #{encoder_lstm_forward.1} parent=0 // pred_fallthru
    _
  // Predicated region
  $region6: #{encoder_lstm_forward.1} parent=0 // pred_check
    _
  $region7: #{encoder_lstm_forward.1} parent=0 // pred_check_branch
    %12 = sbr.rel (0) target = $region9
  $region8: #{encoder_lstm_forward.1} parent=0 // pred_region
    _
  $region9: #{encoder_lstm_forward.1} parent=0 // pred_fallthru
    _
  %p14 = scmp.eq.s32.totalorder 0, 0
  // Predicated region
  $region10: #{encoder_lstm_forward.1} parent=0 // pred_check
    %p15 = pneg %p14
  $region11: #{encoder_lstm_forward.1} parent=0 // pred_check_branch
    %17 = sbr.rel (%p15) target = $region13
  $region12: #{encoder_lstm_forward.1} parent=0 // pred_region
    %18 = vst [vmem:[%s2] sm:$0xf] 0
    %19 = vst [vmem:[%s3] sm:$0xff] 0.0
  $region13: #{encoder_lstm_forward.1} parent=0 // pred_fallthru
    _
  %v20 = vld [vmem:[%s2] sm:$0xf]
  %v21 = vld [vmem:[%s3] sm:$0xff]
  %v22 = vld [vmem:[%s0] sm:$0xff]
  %v23 = vld [vmem:[%s0 + $0x8] sm:$0xff]
  %v24 = vunpack.c.l.bf16 %v22
  %v25 = vunpack.c.h.bf16 %v22
  %v26 = vunpack.c.l.bf16 %v23
  %v27 = vunpack.c.h.bf16 %v23
  %v28 = vld [vmem:[%s1] sm:$0xff]
  %v29 = vld [vmem:[%s1 + $0x8] sm:$0xff]
  %v30 = vld [vmem:[%s1 + $0x10] sm:$0xff]
  %v31 = vld [vmem:[%s1 + $0x18] sm:$0xff]
  %v32 = vld [vmem:[%s1 + $0x20] sm:$0xff]
  %v33 = vld [vmem:[%s1 + $0x28] sm:$0xff]
  %v34 = vld [vmem:[%s1 + $0x30] sm:$0xff]
  %v35 = vld [vmem:[%s1 + $0x38] sm:$0xff]
  %v36 = vld [vmem:[%s1 + $0x40] sm:$0xff]
  %v37 = vld [vmem:[%s1 + $0x48] sm:$0xff]
  %v38 = vld [vmem:[%s1 + $0x50] sm:$0xff]
  %v39 = vld [vmem:[%s1 + $0x58] sm:$0xff]
  %v40 = vld [vmem:[%s1 + $0x60] sm:$0xff]
  %v41 = vld [vmem:[%s1 + $0x68] sm:$0xff]
  %v42 = vld [vmem:[%s1 + $0x70] sm:$0xff]
  %v43 = vld [vmem:[%s1 + $0x78] sm:$0xff]
  %v44 = vld [vmem:[%s1 + $0x80] sm:$0xff]
  %v45 = vld [vmem:[%s1 + $0x88] sm:$0xff]
  %v46 = vld [vmem:[%s1 + $0x90] sm:$0xff]
  %v47 = vld [vmem:[%s1 + $0x98] sm:$0xff]
  %v48 = vld [vmem:[%s1 + $0xa0] sm:$0xff]
  %v49 = vld [vmem:[%s1 + $0xa8] sm:$0xff]
  %v50 = vld [vmem:[%s1 + $0xb0] sm:$0xff]
  %v51 = vld [vmem:[%s1 + $0xb8] sm:$0xff]
  %v52 = vld [vmem:[%s1 + $0xc0] sm:$0xff]
  %v53 = vld [vmem:[%s1 + $0xc8] sm:$0xff]
  %v54 = vld [vmem:[%s1 + $0xd0] sm:$0xff]
  %v55 = vld [vmem:[%s1 + $0xd8] sm:$0xff]
  %v56 = vld [vmem:[%s1 + $0xe0] sm:$0xff]
  %v57 = vld [vmem:[%s1 + $0xe8] sm:$0xff]
  %v58 = vld [vmem:[%s1 + $0xf0] sm:$0xff]
  %v59 = vld [vmem:[%s1 + $0xf8] sm:$0xff]
  %v92 = vunpack.c.l.b16 %v28
  %v93 = vunpack.c.h.b16 %v28
  %v94 = vunpack.c.l.b16 %v29
  %v95 = vunpack.c.h.b16 %v29
  %v96 = vunpack.c.l.b16 %v30
  %v97 = vunpack.c.h.b16 %v30
  %v98 = vunpack.c.l.b16 %v31
  %v99 = vunpack.c.h.b16 %v31
  %v100 = vunpack.c.l.b16 %v32
  %v101 = vunpack.c.h.b16 %v32
  %v102 = vunpack.c.l.b16 %v33
  %v103 = vunpack.c.h.b16 %v33
  %v104 = vunpack.c.l.b16 %v34
  %v105 = vunpack.c.h.b16 %v34
  %v106 = vunpack.c.l.b16 %v35
  %v107 = vunpack.c.h.b16 %v35
  %v108 = vunpack.c.l.b16 %v36
  %v109 = vunpack.c.h.b16 %v36
  %v110 = vunpack.c.l.b16 %v37
  %v111 = vunpack.c.h.b16 %v37
  %v112 = vunpack.c.l.b16 %v38
  %v113 = vunpack.c.h.b16 %v38
  %v114 = vunpack.c.l.b16 %v39
  %v115 = vunpack.c.h.b16 %v39
  %v116 = vunpack.c.l.b16 %v40
  %v117 = vunpack.c.h.b16 %v40
  %v118 = vunpack.c.l.b16 %v41
  %v119 = vunpack.c.h.b16 %v41
  %v120 = vunpack.c.l.b16 %v42
  %v121 = vunpack.c.h.b16 %v42
  %v122 = vunpack.c.l.b16 %v43
  %v123 = vunpack.c.h.b16 %v43
  %v124 = vunpack.c.l.b16 %v44
  %v125 = vunpack.c.h.b16 %v44
  %v126 = vunpack.c.l.b16 %v45
  %v127 = vunpack.c.h.b16 %v45
  %v128 = vunpack.c.l.b16 %v46
  %v129 = vunpack.c.h.b16 %v46
  %v130 = vunpack.c.l.b16 %v47
  %v131 = vunpack.c.h.b16 %v47
  %v132 = vunpack.c.l.b16 %v48
  %v133 = vunpack.c.h.b16 %v48
  %v134 = vunpack.c.l.b16 %v49
  %v135 = vunpack.c.h.b16 %v49
  %v136 = vunpack.c.l.b16 %v50
  %v137 = vunpack.c.h.b16 %v50
  %v138 = vunpack.c.l.b16 %v51
  %v139 = vunpack.c.h.b16 %v51
  %v140 = vunpack.c.l.b16 %v52
  %v141 = vunpack.c.h.b16 %v52
  %v142 = vunpack.c.l.b16 %v53
  %v143 = vunpack.c.h.b16 %v53
  %v144 = vunpack.c.l.b16 %v54
  %v145 = vunpack.c.h.b16 %v54
  %v146 = vunpack.c.l.b16 %v55
  %v147 = vunpack.c.h.b16 %v55
  %v148 = vunpack.c.l.b16 %v56
  %v149 = vunpack.c.h.b16 %v56
  %v150 = vunpack.c.l.b16 %v57
  %v151 = vunpack.c.h.b16 %v57
  %v152 = vunpack.c.l.b16 %v58
  %v153 = vunpack.c.h.b16 %v58
  %v154 = vunpack.c.l.b16 %v59
  %v155 = vunpack.c.h.b16 %v59
  %v156 = vpack.c.b16 %v96, %v92
  %v157 = vpack.c.b16 %v97, %v93
  %v158 = vpack.c.b16 %v98, %v94
  %v159 = vpack.c.b16 %v99, %v95
  %v160 = vpack.c.b16 %v104, %v100
  %v161 = vpack.c.b16 %v105, %v101
  %v162 = vpack.c.b16 %v106, %v102
  %v163 = vpack.c.b16 %v107, %v103
  %v164 = vpack.c.b16 %v112, %v108
  %v165 = vpack.c.b16 %v113, %v109
  %v166 = vpack.c.b16 %v114, %v110
  %v167 = vpack.c.b16 %v115, %v111
  %v168 = vpack.c.b16 %v120, %v116
  %v169 = vpack.c.b16 %v121, %v117
  %v170 = vpack.c.b16 %v122, %v118
  %v171 = vpack.c.b16 %v123, %v119
  %v172 = vpack.c.b16 %v128, %v124
  %v173 = vpack.c.b16 %v129, %v125
  %v174 = vpack.c.b16 %v130, %v126
  %v175 = vpack.c.b16 %v131, %v127
  %v176 = vpack.c.b16 %v136, %v132
  %v177 = vpack.c.b16 %v137, %v133
  %v178 = vpack.c.b16 %v138, %v134
  %v179 = vpack.c.b16 %v139, %v135
  %v180 = vpack.c.b16 %v144, %v140
  %v181 = vpack.c.b16 %v145, %v141
  %v182 = vpack.c.b16 %v146, %v142
  %v183 = vpack.c.b16 %v147, %v143
  %v184 = vpack.c.b16 %v152, %v148
  %v185 = vpack.c.b16 %v153, %v149
  %v186 = vpack.c.b16 %v154, %v150
  %v187 = vpack.c.b16 %v155, %v151
  %220 = vmatpush.bf16.msra.mxu0 %v184
  %221 = vmatpush.bf16.msra.mxu0 %v180
  %222 = vmatpush.bf16.msra.mxu0 %v176
  %223 = vmatpush.bf16.msra.mxu0 %v172
  %224 = vmatpush.bf16.msra.mxu0 %v168
  %225 = vmatpush.bf16.msra.mxu0 %v164
  %226 = vmatpush.bf16.msra.mxu0 %v160
  %227 = vmatpush.bf16.msra.mxu0 %v156
  %228 = vmatmul.bf16.gmra.mxu0 %v20
  %v229 = vpop.f32.mrf.mxu0
  %v230 = vadd.f32 0.0, %v229
  %v231 = vpop.f32.mrf.mxu0
  %232 = vdwg.mxu0
  %233 = vmatpush.bf16.msra.mxu0 %v185
  %234 = vmatpush.bf16.msra.mxu0 %v181
  %235 = vmatpush.bf16.msra.mxu0 %v177
  %236 = vmatpush.bf16.msra.mxu0 %v173
  %237 = vmatpush.bf16.msra.mxu0 %v169
  %238 = vmatpush.bf16.msra.mxu0 %v165
  %239 = vmatpush.bf16.msra.mxu0 %v161
  %240 = vmatpush.bf16.msra.mxu0 %v157
  %241 = vmatmul.bf16.gmra.mxu0 %v20
  %v242 = vpop.f32.mrf.mxu0
  %v243 = vadd.f32 0.0, %v242
  %v244 = vpop.f32.mrf.mxu0
  %245 = vdwg.mxu0
  %246 = vmatpush.bf16.msra.mxu0 %v186
  %247 = vmatpush.bf16.msra.mxu0 %v182
  %248 = vmatpush.bf16.msra.mxu0 %v178
  %249 = vmatpush.bf16.msra.mxu0 %v174
  %250 = vmatpush.bf16.msra.mxu0 %v170
  %251 = vmatpush.bf16.msra.mxu0 %v166
  %252 = vmatpush.bf16.msra.mxu0 %v162
  %253 = vmatpush.bf16.msra.mxu0 %v158
  %254 = vmatmul.bf16.gmra.mxu0 %v20
  %v255 = vpop.f32.mrf.mxu0
  %v256 = vadd.f32 0.0, %v255
  %v257 = vpop.f32.mrf.mxu0
  %258 = vdwg.mxu0
  %259 = vmatpush.bf16.msra.mxu0 %v187
  %260 = vmatpush.bf16.msra.mxu0 %v183
  %261 = vmatpush.bf16.msra.mxu0 %v179
  %262 = vmatpush.bf16.msra.mxu0 %v175
  %263 = vmatpush.bf16.msra.mxu0 %v171
  %264 = vmatpush.bf16.msra.mxu0 %v167
  %265 = vmatpush.bf16.msra.mxu0 %v163
  %266 = vmatpush.bf16.msra.mxu0 %v159
  %267 = vmatmul.bf16.gmra.mxu0 %v20
  %v268 = vpop.f32.mrf.mxu0
  %v269 = vadd.f32 0.0, %v268
  %v270 = vpop.f32.mrf.mxu0
  %271 = vdwg.mxu0
  %v272 = vadd.f32 %v24, %v230
  %v273 = vadd.f32 %v25, %v243
  %v274 = vadd.f32 %v26, %v256
  %v275 = vadd.f32 %v27, %v269
  %v276 = vtanh.pop %v272
  %v277 = vtanh.pop %v273
  %v278 = vtanh.pop %v274
  %v279 = vtanh.pop %v275
  %v280 = vmul.f32 %v276, 0.5
  %v281 = vadd.f32 %v280, 0.5
  %v282 = vmul.f32 %v277, 0.5
  %v283 = vadd.f32 %v282, 0.5
  %v284 = vmul.f32 %v279, 0.5
  %v285 = vadd.f32 %v284, 0.5
  %v286 = vmul.f32 %v283, %v21
  %v287 = vmul.f32 %v281, %v278
  %v288 = vadd.f32 %v286, %v287
  %v289 = vtanh.pop %v288
  %v290 = vmul.f32 %v285, %v289
  %v291 = vpack.c.bf16 %v290, %v290
  %s292 = scalar_lea.vmem %s0, 16
  %v293 = vld [vmem:[%s292] sm:$0xff]
  %v294 = vld [vmem:[%s292 + $0x8] sm:$0xff]
  %v295 = vunpack.c.l.bf16 %v293
  %v296 = vunpack.c.h.bf16 %v293
  %v297 = vunpack.c.l.bf16 %v294
  %v298 = vunpack.c.h.bf16 %v294
  %299 = vmatpush.bf16.msra.mxu0 %v184
  %300 = vmatpush.bf16.msra.mxu0 %v180
  %301 = vmatpush.bf16.msra.mxu0 %v176
  %302 = vmatpush.bf16.msra.mxu0 %v172
  %303 = vmatpush.bf16.msra.mxu0 %v168
  %304 = vmatpush.bf16.msra.mxu0 %v164
  %305 = vmatpush.bf16.msra.mxu0 %v160
  %306 = vmatpush.bf16.msra.mxu0 %v156
  %307 = vmatmul.bf16.gmra.mxu0 %v291
  %v308 = vpop.f32.mrf.mxu0
  %v309 = vadd.f32 0.0, %v308
  %v310 = vpop.f32.mrf.mxu0
  %311 = vdwg.mxu0
  %312 = vmatpush.bf16.msra.mxu0 %v185
  %313 = vmatpush.bf16.msra.mxu0 %v181
  %314 = vmatpush.bf16.msra.mxu0 %v177
  %315 = vmatpush.bf16.msra.mxu0 %v173
  %316 = vmatpush.bf16.msra.mxu0 %v169
  %317 = vmatpush.bf16.msra.mxu0 %v165
  %318 = vmatpush.bf16.msra.mxu0 %v161
  %319 = vmatpush.bf16.msra.mxu0 %v157
  %320 = vmatmul.bf16.gmra.mxu0 %v291
  %v321 = vpop.f32.mrf.mxu0
  %v322 = vadd.f32 0.0, %v321
  %v323 = vpop.f32.mrf.mxu0
  %324 = vdwg.mxu0
  %325 = vmatpush.bf16.msra.mxu0 %v186
  %326 = vmatpush.bf16.msra.mxu0 %v182
  %327 = vmatpush.bf16.msra.mxu0 %v178
  %328 = vmatpush.bf16.msra.mxu0 %v174
  %329 = vmatpush.bf16.msra.mxu0 %v170
  %330 = vmatpush.bf16.msra.mxu0 %v166
  %331 = vmatpush.bf16.msra.mxu0 %v162
  %332 = vmatpush.bf16.msra.mxu0 %v158
  %333 = vmatmul.bf16.gmra.mxu0 %v291
  %v334 = vpop.f32.mrf.mxu0
  %v335 = vadd.f32 0.0, %v334
  %v336 = vpop.f32.mrf.mxu0
  %337 = vdwg.mxu0
  %338 = vmatpush.bf16.msra.mxu0 %v187
  %339 = vmatpush.bf16.msra.mxu0 %v183
  %340 = vmatpush.bf16.msra.mxu0 %v179
  %341 = vmatpush.bf16.msra.mxu0 %v175
  %342 = vmatpush.bf16.msra.mxu0 %v171
  %343 = vmatpush.bf16.msra.mxu0 %v167
  %344 = vmatpush.bf16.msra.mxu0 %v163
  %345 = vmatpush.bf16.msra.mxu0 %v159
  %346 = vmatmul.bf16.gmra.mxu0 %v291
  %v347 = vpop.f32.mrf.mxu0
  %v348 = vadd.f32 0.0, %v347
  %v349 = vpop.f32.mrf.mxu0
  %350 = vdwg.mxu0
  %v351 = vadd.f32 %v295, %v309
  %v352 = vadd.f32 %v296, %v322
  %v353 = vadd.f32 %v297, %v335
  %v354 = vadd.f32 %v298, %v348
  %v355 = vtanh.pop %v351
  %v356 = vtanh.pop %v352
  %v357 = vtanh.pop %v353
  %v358 = vtanh.pop %v354
  %v359 = vmul.f32 %v355, 0.5
  %v360 = vadd.f32 %v359, 0.5
  %v361 = vmul.f32 %v356, 0.5
  %v362 = vadd.f32 %v361, 0.5
  %v363 = vmul.f32 %v358, 0.5
  %v364 = vadd.f32 %v363, 0.5
  %v365 = vmul.f32 %v362, %v288
  %v366 = vmul.f32 %v360, %v357
  %v367 = vadd.f32 %v365, %v366
  %v368 = vtanh.pop %v367
  %v369 = vmul.f32 %v364, %v368
  %v370 = vpack.c.bf16 %v369, %v369
  %s371 = scalar_lea.vmem %s0, 32
  %v372 = vld [vmem:[%s371] sm:$0xff]
  %v373 = vld [vmem:[%s371 + $0x8] sm:$0xff]
  %v374 = vunpack.c.l.bf16 %v372
  %v375 = vunpack.c.h.bf16 %v372
  %v376 = vunpack.c.l.bf16 %v373
  %v377 = vunpack.c.h.bf16 %v373
  %378 = vmatpush.bf16.msra.mxu0 %v184
  %379 = vmatpush.bf16.msra.mxu0 %v180
  %380 = vmatpush.bf16.msra.mxu0 %v176
  %381 = vmatpush.bf16.msra.mxu0 %v172
  %382 = vmatpush.bf16.msra.mxu0 %v168
  %383 = vmatpush.bf16.msra.mxu0 %v164
  %384 = vmatpush.bf16.msra.mxu0 %v160
  %385 = vmatpush.bf16.msra.mxu0 %v156
  %386 = vmatmul.bf16.gmra.mxu0 %v370
  %v387 = vpop.f32.mrf.mxu0
  %v388 = vadd.f32 0.0, %v387
  %v389 = vpop.f32.mrf.mxu0
  %390 = vdwg.mxu0
  %391 = vmatpush.bf16.msra.mxu0 %v185
  %392 = vmatpush.bf16.msra.mxu0 %v181
  %393 = vmatpush.bf16.msra.mxu0 %v177
  %394 = vmatpush.bf16.msra.mxu0 %v173
  %395 = vmatpush.bf16.msra.mxu0 %v169
  %396 = vmatpush.bf16.msra.mxu0 %v165
  %397 = vmatpush.bf16.msra.mxu0 %v161
  %398 = vmatpush.bf16.msra.mxu0 %v157
  %399 = vmatmul.bf16.gmra.mxu0 %v370
  %v400 = vpop.f32.mrf.mxu0
  %v401 = vadd.f32 0.0, %v400
  %v402 = vpop.f32.mrf.mxu0
  %403 = vdwg.mxu0
  %404 = vmatpush.bf16.msra.mxu0 %v186
  %405 = vmatpush.bf16.msra.mxu0 %v182
  %406 = vmatpush.bf16.msra.mxu0 %v178
  %407 = vmatpush.bf16.msra.mxu0 %v174
  %408 = vmatpush.bf16.msra.mxu0 %v170
  %409 = vmatpush.bf16.msra.mxu0 %v166
  %410 = vmatpush.bf16.msra.mxu0 %v162
  %411 = vmatpush.bf16.msra.mxu0 %v158
  %412 = vmatmul.bf16.gmra.mxu0 %v370
  %v413 = vpop.f32.mrf.mxu0
  %v414 = vadd.f32 0.0, %v413
  %v415 = vpop.f32.mrf.mxu0
  %416 = vdwg.mxu0
  %417 = vmatpush.bf16.msra.mxu0 %v187
  %418 = vmatpush.bf16.msra.mxu0 %v183
  %419 = vmatpush.bf16.msra.mxu0 %v179
  %420 = vmatpush.bf16.msra.mxu0 %v175
  %421 = vmatpush.bf16.msra.mxu0 %v171
  %422 = vmatpush.bf16.msra.mxu0 %v167
  %423 = vmatpush.bf16.msra.mxu0 %v163
  %424 = vmatpush.bf16.msra.mxu0 %v159
  %425 = vmatmul.bf16.gmra.mxu0 %v370
  %v426 = vpop.f32.mrf.mxu0
  %v427 = vadd.f32 0.0, %v426
  %v428 = vpop.f32.mrf.mxu0
  %429 = vdwg.mxu0
  %v430 = vadd.f32 %v374, %v388
  %v431 = vadd.f32 %v375, %v401
  %v432 = vadd.f32 %v376, %v414
  %v433 = vadd.f32 %v377, %v427
  %v434 = vtanh.pop %v430
  %v435 = vtanh.pop %v431
  %v436 = vtanh.pop %v432
  %v437 = vtanh.pop %v433
  %v438 = vmul.f32 %v434, 0.5
  %v439 = vadd.f32 %v438, 0.5
  %v440 = vmul.f32 %v435, 0.5
  %v441 = vadd.f32 %v440, 0.5
  %v442 = vmul.f32 %v437, 0.5
  %v443 = vadd.f32 %v442, 0.5
  %v444 = vmul.f32 %v441, %v367
  %v445 = vmul.f32 %v439, %v436
  %v446 = vadd.f32 %v444, %v445
  %v447 = vtanh.pop %v446
  %v448 = vmul.f32 %v443, %v447
  %v449 = vpack.c.bf16 %v448, %v448
  %s450 = scalar_lea.vmem %s0, 48
  %v451 = vld [vmem:[%s450] sm:$0xff]
  %v452 = vld [vmem:[%s450 + $0x8] sm:$0xff]
  %v453 = vunpack.c.l.bf16 %v451
  %v454 = vunpack.c.h.bf16 %v451
  %v455 = vunpack.c.l.bf16 %v452
  %v456 = vunpack.c.h.bf16 %v452
  %457 = vmatpush.bf16.msra.mxu0 %v184
  %458 = vmatpush.bf16.msra.mxu0 %v180
  %459 = vmatpush.bf16.msra.mxu0 %v176
  %460 = vmatpush.bf16.msra.mxu0 %v172
  %461 = vmatpush.bf16.msra.mxu0 %v168
  %462 = vmatpush.bf16.msra.mxu0 %v164
  %463 = vmatpush.bf16.msra.mxu0 %v160
  %464 = vmatpush.bf16.msra.mxu0 %v156
  %465 = vmatmul.bf16.gmra.mxu0 %v449
  %v466 = vpop.f32.mrf.mxu0
  %v467 = vadd.f32 0.0, %v466
  %v468 = vpop.f32.mrf.mxu0
  %469 = vdwg.mxu0
  %470 = vmatpush.bf16.msra.mxu0 %v185
  %471 = vmatpush.bf16.msra.mxu0 %v181
  %472 = vmatpush.bf16.msra.mxu0 %v177
  %473 = vmatpush.bf16.msra.mxu0 %v173
  %474 = vmatpush.bf16.msra.mxu0 %v169
  %475 = vmatpush.bf16.msra.mxu0 %v165
  %476 = vmatpush.bf16.msra.mxu0 %v161
  %477 = vmatpush.bf16.msra.mxu0 %v157
  %478 = vmatmul.bf16.gmra.mxu0 %v449
  %v479 = vpop.f32.mrf.mxu0
  %v480 = vadd.f32 0.0, %v479
  %v481 = vpop.f32.mrf.mxu0
  %482 = vdwg.mxu0
  %483 = vmatpush.bf16.msra.mxu0 %v186
  %484 = vmatpush.bf16.msra.mxu0 %v182
  %485 = vmatpush.bf16.msra.mxu0 %v178
  %486 = vmatpush.bf16.msra.mxu0 %v174
  %487 = vmatpush.bf16.msra.mxu0 %v170
  %488 = vmatpush.bf16.msra.mxu0 %v166
  %489 = vmatpush.bf16.msra.mxu0 %v162
  %490 = vmatpush.bf16.msra.mxu0 %v158
  %491 = vmatmul.bf16.gmra.mxu0 %v449
  %v492 = vpop.f32.mrf.mxu0
  %v493 = vadd.f32 0.0, %v492
  %v494 = vpop.f32.mrf.mxu0
  %495 = vdwg.mxu0
  %496 = vmatpush.bf16.msra.mxu0 %v187
  %497 = vmatpush.bf16.msra.mxu0 %v183
  %498 = vmatpush.bf16.msra.mxu0 %v179
  %499 = vmatpush.bf16.msra.mxu0 %v175
  %500 = vmatpush.bf16.msra.mxu0 %v171
  %501 = vmatpush.bf16.msra.mxu0 %v167
  %502 = vmatpush.bf16.msra.mxu0 %v163
  %503 = vmatpush.bf16.msra.mxu0 %v159
  %504 = vmatmul.bf16.gmra.mxu0 %v449
  %v505 = vpop.f32.mrf.mxu0
  %v506 = vadd.f32 0.0, %v505
  %v507 = vpop.f32.mrf.mxu0
  %508 = vdwg.mxu0
  %v509 = vadd.f32 %v453, %v467
  %v510 = vadd.f32 %v454, %v480
  %v511 = vadd.f32 %v455, %v493
  %v512 = vadd.f32 %v456, %v506
  %v513 = vtanh.pop %v509
  %v514 = vtanh.pop %v510
  %v515 = vtanh.pop %v511
  %v516 = vtanh.pop %v512
  %v517 = vmul.f32 %v513, 0.5
  %v518 = vadd.f32 %v517, 0.5
  %v519 = vmul.f32 %v514, 0.5
  %v520 = vadd.f32 %v519, 0.5
  %v521 = vmul.f32 %v516, 0.5
  %v522 = vadd.f32 %v521, 0.5
  %v523 = vmul.f32 %v520, %v446
  %v524 = vmul.f32 %v518, %v515
  %v525 = vadd.f32 %v523, %v524
  %v526 = vtanh.pop %v525
  %v527 = vmul.f32 %v522, %v526
  %v528 = vpack.c.bf16 %v527, %v527
  %s529 = scalar_lea.vmem %s0, 64
  %v530 = vld [vmem:[%s529] sm:$0xff]
  %v531 = vld [vmem:[%s529 + $0x8] sm:$0xff]
  %v532 = vunpack.c.l.bf16 %v530
  %v533 = vunpack.c.h.bf16 %v530
  %v534 = vunpack.c.l.bf16 %v531
  %v535 = vunpack.c.h.bf16 %v531
  %536 = vmatpush.bf16.msra.mxu0 %v184
  %537 = vmatpush.bf16.msra.mxu0 %v180
  %538 = vmatpush.bf16.msra.mxu0 %v176
  %539 = vmatpush.bf16.msra.mxu0 %v172
  %540 = vmatpush.bf16.msra.mxu0 %v168
  %541 = vmatpush.bf16.msra.mxu0 %v164
  %542 = vmatpush.bf16.msra.mxu0 %v160
  %543 = vmatpush.bf16.msra.mxu0 %v156
  %544 = vmatmul.bf16.gmra.mxu0 %v528
  %v545 = vpop.f32.mrf.mxu0
  %v546 = vadd.f32 0.0, %v545
  %v547 = vpop.f32.mrf.mxu0
  %548 = vdwg.mxu0
  %549 = vmatpush.bf16.msra.mxu0 %v185
  %550 = vmatpush.bf16.msra.mxu0 %v181
  %551 = vmatpush.bf16.msra.mxu0 %v177
  %552 = vmatpush.bf16.msra.mxu0 %v173
  %553 = vmatpush.bf16.msra.mxu0 %v169
  %554 = vmatpush.bf16.msra.mxu0 %v165
  %555 = vmatpush.bf16.msra.mxu0 %v161
  %556 = vmatpush.bf16.msra.mxu0 %v157
  %557 = vmatmul.bf16.gmra.mxu0 %v528
  %v558 = vpop.f32.mrf.mxu0
  %v559 = vadd.f32 0.0, %v558
  %v560 = vpop.f32.mrf.mxu0
  %561 = vdwg.mxu0
  %562 = vmatpush.bf16.msra.mxu0 %v186
  %563 = vmatpush.bf16.msra.mxu0 %v182
  %564 = vmatpush.bf16.msra.mxu0 %v178
  %565 = vmatpush.bf16.msra.mxu0 %v174
  %566 = vmatpush.bf16.msra.mxu0 %v170
  %567 = vmatpush.bf16.msra.mxu0 %v166
  %568 = vmatpush.bf16.msra.mxu0 %v162
  %569 = vmatpush.bf16.msra.mxu0 %v158
  %570 = vmatmul.bf16.gmra.mxu0 %v528
  %v571 = vpop.f32.mrf.mxu0
  %v572 = vadd.f32 0.0, %v571
  %v573 = vpop.f32.mrf.mxu0
  %574 = vdwg.mxu0
  %575 = vmatpush.bf16.msra.mxu0 %v187
  %576 = vmatpush.bf16.msra.mxu0 %v183
  %577 = vmatpush.bf16.msra.mxu0 %v179
  %578 = vmatpush.bf16.msra.mxu0 %v175
  %579 = vmatpush.bf16.msra.mxu0 %v171
  %580 = vmatpush.bf16.msra.mxu0 %v167
  %581 = vmatpush.bf16.msra.mxu0 %v163
  %582 = vmatpush.bf16.msra.mxu0 %v159
  %583 = vmatmul.bf16.gmra.mxu0 %v528
  %v584 = vpop.f32.mrf.mxu0
  %v585 = vadd.f32 0.0, %v584
  %v586 = vpop.f32.mrf.mxu0
  %587 = vdwg.mxu0
  %v588 = vadd.f32 %v532, %v546
  %v589 = vadd.f32 %v533, %v559
  %v590 = vadd.f32 %v534, %v572
  %v591 = vadd.f32 %v535, %v585
  %v592 = vtanh.pop %v588
  %v593 = vtanh.pop %v589
  %v594 = vtanh.pop %v590
  %v595 = vtanh.pop %v591
  %v596 = vmul.f32 %v592, 0.5
  %v597 = vadd.f32 %v596, 0.5
  %v598 = vmul.f32 %v593, 0.5
  %v599 = vadd.f32 %v598, 0.5
  %v600 = vmul.f32 %v595, 0.5
  %v601 = vadd.f32 %v600, 0.5
  %v602 = vmul.f32 %v599, %v525
  %v603 = vmul.f32 %v597, %v594
  %v604 = vadd.f32 %v602, %v603
  %v605 = vtanh.pop %v604
  %v606 = vmul.f32 %v601, %v605
  %v607 = vpack.c.bf16 %v606, %v606
  %s608 = scalar_lea.vmem %s0, 80
  %v609 = vld [vmem:[%s608] sm:$0xff]
  %v610 = vld [vmem:[%s608 + $0x8] sm:$0xff]
  %v611 = vunpack.c.l.bf16 %v609
  %v612 = vunpack.c.h.bf16 %v609
  %v613 = vunpack.c.l.bf16 %v610
  %v614 = vunpack.c.h.bf16 %v610
  %615 = vmatpush.bf16.msra.mxu0 %v184
  %616 = vmatpush.bf16.msra.mxu0 %v180
  %617 = vmatpush.bf16.msra.mxu0 %v176
  %618 = vmatpush.bf16.msra.mxu0 %v172
  %619 = vmatpush.bf16.msra.mxu0 %v168
  %620 = vmatpush.bf16.msra.mxu0 %v164
  %621 = vmatpush.bf16.msra.mxu0 %v160
  %622 = vmatpush.bf16.msra.mxu0 %v156
  %623 = vmatmul.bf16.gmra.mxu0 %v607
  %v624 = vpop.f32.mrf.mxu0
  %v625 = vadd.f32 0.0, %v624
  %v626 = vpop.f32.mrf.mxu0
  %627 = vdwg.mxu0
  %628 = vmatpush.bf16.msra.mxu0 %v185
  %629 = vmatpush.bf16.msra.mxu0 %v181
  %630 = vmatpush.bf16.msra.mxu0 %v177
  %631 = vmatpush.bf16.msra.mxu0 %v173
  %632 = vmatpush.bf16.msra.mxu0 %v169
  %633 = vmatpush.bf16.msra.mxu0 %v165
  %634 = vmatpush.bf16.msra.mxu0 %v161
  %635 = vmatpush.bf16.msra.mxu0 %v157
  %636 = vmatmul.bf16.gmra.mxu0 %v607
  %v637 = vpop.f32.mrf.mxu0
  %v638 = vadd.f32 0.0, %v637
  %v639 = vpop.f32.mrf.mxu0
  %640 = vdwg.mxu0
  %641 = vmatpush.bf16.msra.mxu0 %v186
  %642 = vmatpush.bf16.msra.mxu0 %v182
  %643 = vmatpush.bf16.msra.mxu0 %v178
  %644 = vmatpush.bf16.msra.mxu0 %v174
  %645 = vmatpush.bf16.msra.mxu0 %v170
  %646 = vmatpush.bf16.msra.mxu0 %v166
  %647 = vmatpush.bf16.msra.mxu0 %v162
  %648 = vmatpush.bf16.msra.mxu0 %v158
  %649 = vmatmul.bf16.gmra.mxu0 %v607
  %v650 = vpop.f32.mrf.mxu0
  %v651 = vadd.f32 0.0, %v650
  %v652 = vpop.f32.mrf.mxu0
  %653 = vdwg.mxu0
  %654 = vmatpush.bf16.msra.mxu0 %v187
  %655 = vmatpush.bf16.msra.mxu0 %v183
  %656 = vmatpush.bf16.msra.mxu0 %v179
  %657 = vmatpush.bf16.msra.mxu0 %v175
  %658 = vmatpush.bf16.msra.mxu0 %v171
  %659 = vmatpush.bf16.msra.mxu0 %v167
  %660 = vmatpush.bf16.msra.mxu0 %v163
  %661 = vmatpush.bf16.msra.mxu0 %v159
  %662 = vmatmul.bf16.gmra.mxu0 %v607
  %v663 = vpop.f32.mrf.mxu0
  %v664 = vadd.f32 0.0, %v663
  %v665 = vpop.f32.mrf.mxu0
  %666 = vdwg.mxu0
  %v667 = vadd.f32 %v611, %v625
  %v668 = vadd.f32 %v612, %v638
  %v669 = vadd.f32 %v613, %v651
  %v670 = vadd.f32 %v614, %v664
  %v671 = vtanh.pop %v667
  %v672 = vtanh.pop %v668
  %v673 = vtanh.pop %v669
  %v674 = vtanh.pop %v670
  %v675 = vmul.f32 %v671, 0.5
  %v676 = vadd.f32 %v675, 0.5
  %v677 = vmul.f32 %v672, 0.5
  %v678 = vadd.f32 %v677, 0.5
  %v679 = vmul.f32 %v674, 0.5
  %v680 = vadd.f32 %v679, 0.5
  %v681 = vmul.f32 %v678, %v604
  %v682 = vmul.f32 %v676, %v673
  %v683 = vadd.f32 %v681, %v682
  %v684 = vtanh.pop %v683
  %v685 = vmul.f32 %v680, %v684
  %v686 = vpack.c.bf16 %v685, %v685
  %s687 = scalar_lea.vmem %s0, 96
  %v688 = vld [vmem:[%s687] sm:$0xff]
  %v689 = vld [vmem:[%s687 + $0x8] sm:$0xff]
  %v690 = vunpack.c.l.bf16 %v688
  %v691 = vunpack.c.h.bf16 %v688
  %v692 = vunpack.c.l.bf16 %v689
  %v693 = vunpack.c.h.bf16 %v689
  %694 = vmatpush.bf16.msra.mxu0 %v184
  %695 = vmatpush.bf16.msra.mxu0 %v180
  %696 = vmatpush.bf16.msra.mxu0 %v176
  %697 = vmatpush.bf16.msra.mxu0 %v172
  %698 = vmatpush.bf16.msra.mxu0 %v168
  %699 = vmatpush.bf16.msra.mxu0 %v164
  %700 = vmatpush.bf16.msra.mxu0 %v160
  %701 = vmatpush.bf16.msra.mxu0 %v156
  %702 = vmatmul.bf16.gmra.mxu0 %v686
  %v703 = vpop.f32.mrf.mxu0
  %v704 = vadd.f32 0.0, %v703
  %v705 = vpop.f32.mrf.mxu0
  %706 = vdwg.mxu0
  %707 = vmatpush.bf16.msra.mxu0 %v185
  %708 = vmatpush.bf16.msra.mxu0 %v181
  %709 = vmatpush.bf16.msra.mxu0 %v177
  %710 = vmatpush.bf16.msra.mxu0 %v173
  %711 = vmatpush.bf16.msra.mxu0 %v169
  %712 = vmatpush.bf16.msra.mxu0 %v165
  %713 = vmatpush.bf16.msra.mxu0 %v161
  %714 = vmatpush.bf16.msra.mxu0 %v157
  %715 = vmatmul.bf16.gmra.mxu0 %v686
  %v716 = vpop.f32.mrf.mxu0
  %v717 = vadd.f32 0.0, %v716
  %v718 = vpop.f32.mrf.mxu0
  %719 = vdwg.mxu0
  %720 = vmatpush.bf16.msra.mxu0 %v186
  %721 = vmatpush.bf16.msra.mxu0 %v182
  %722 = vmatpush.bf16.msra.mxu0 %v178
  %723 = vmatpush.bf16.msra.mxu0 %v174
  %724 = vmatpush.bf16.msra.mxu0 %v170
  %725 = vmatpush.bf16.msra.mxu0 %v166
  %726 = vmatpush.bf16.msra.mxu0 %v162
  %727 = vmatpush.bf16.msra.mxu0 %v158
  %728 = vmatmul.bf16.gmra.mxu0 %v686
  %v729 = vpop.f32.mrf.mxu0
  %v730 = vadd.f32 0.0, %v729
  %v731 = vpop.f32.mrf.mxu0
  %732 = vdwg.mxu0
  %733 = vmatpush.bf16.msra.mxu0 %v187
  %734 = vmatpush.bf16.msra.mxu0 %v183
  %735 = vmatpush.bf16.msra.mxu0 %v179
  %736 = vmatpush.bf16.msra.mxu0 %v175
  %737 = vmatpush.bf16.msra.mxu0 %v171
  %738 = vmatpush.bf16.msra.mxu0 %v167
  %739 = vmatpush.bf16.msra.mxu0 %v163
  %740 = vmatpush.bf16.msra.mxu0 %v159
  %741 = vmatmul.bf16.gmra.mxu0 %v686
  %v742 = vpop.f32.mrf.mxu0
  %v743 = vadd.f32 0.0, %v742
  %v744 = vpop.f32.mrf.mxu0
  %745 = vdwg.mxu0
  %v746 = vadd.f32 %v690, %v704
  %v747 = vadd.f32 %v691, %v717
  %v748 = vadd.f32 %v692, %v730
  %v749 = vadd.f32 %v693, %v743
  %v750 = vtanh.pop %v746
  %v751 = vtanh.pop %v747
  %v752 = vtanh.pop %v748
  %v753 = vtanh.pop %v749
  %v754 = vmul.f32 %v750, 0.5
  %v755 = vadd.f32 %v754, 0.5
  %v756 = vmul.f32 %v751, 0.5
  %v757 = vadd.f32 %v756, 0.5
  %v758 = vmul.f32 %v753, 0.5
  %v759 = vadd.f32 %v758, 0.5
  %v760 = vmul.f32 %v757, %v683
  %v761 = vmul.f32 %v755, %v752
  %v762 = vadd.f32 %v760, %v761
  %v763 = vtanh.pop %v762
  %v764 = vmul.f32 %v759, %v763
  %v765 = vpack.c.bf16 %v764, %v764
  %s766 = scalar_lea.vmem %s0, 112
  %v767 = vld [vmem:[%s766] sm:$0xff]
  %v768 = vld [vmem:[%s766 + $0x8] sm:$0xff]
  %v769 = vunpack.c.l.bf16 %v767
  %v770 = vunpack.c.h.bf16 %v767
  %v771 = vunpack.c.l.bf16 %v768
  %v772 = vunpack.c.h.bf16 %v768
  %773 = vmatpush.bf16.msra.mxu0 %v184
  %774 = vmatpush.bf16.msra.mxu0 %v180
  %775 = vmatpush.bf16.msra.mxu0 %v176
  %776 = vmatpush.bf16.msra.mxu0 %v172
  %777 = vmatpush.bf16.msra.mxu0 %v168
  %778 = vmatpush.bf16.msra.mxu0 %v164
  %779 = vmatpush.bf16.msra.mxu0 %v160
  %780 = vmatpush.bf16.msra.mxu0 %v156
  %781 = vmatmul.bf16.gmra.mxu0 %v765
  %v782 = vpop.f32.mrf.mxu0
  %v783 = vadd.f32 0.0, %v782
  %v784 = vpop.f32.mrf.mxu0
  %785 = vdwg.mxu0
  %786 = vmatpush.bf16.msra.mxu0 %v185
  %787 = vmatpush.bf16.msra.mxu0 %v181
  %788 = vmatpush.bf16.msra.mxu0 %v177
  %789 = vmatpush.bf16.msra.mxu0 %v173
  %790 = vmatpush.bf16.msra.mxu0 %v169
  %791 = vmatpush.bf16.msra.mxu0 %v165
  %792 = vmatpush.bf16.msra.mxu0 %v161
  %793 = vmatpush.bf16.msra.mxu0 %v157
  %794 = vmatmul.bf16.gmra.mxu0 %v765
  %v795 = vpop.f32.mrf.mxu0
  %v796 = vadd.f32 0.0, %v795
  %v797 = vpop.f32.mrf.mxu0
  %798 = vdwg.mxu0
  %799 = vmatpush.bf16.msra.mxu0 %v186
  %800 = vmatpush.bf16.msra.mxu0 %v182
  %801 = vmatpush.bf16.msra.mxu0 %v178
  %802 = vmatpush.bf16.msra.mxu0 %v174
  %803 = vmatpush.bf16.msra.mxu0 %v170
  %804 = vmatpush.bf16.msra.mxu0 %v166
  %805 = vmatpush.bf16.msra.mxu0 %v162
  %806 = vmatpush.bf16.msra.mxu0 %v158
  %807 = vmatmul.bf16.gmra.mxu0 %v765
  %v808 = vpop.f32.mrf.mxu0
  %v809 = vadd.f32 0.0, %v808
  %v810 = vpop.f32.mrf.mxu0
  %811 = vdwg.mxu0
  %812 = vmatpush.bf16.msra.mxu0 %v187
  %813 = vmatpush.bf16.msra.mxu0 %v183
  %814 = vmatpush.bf16.msra.mxu0 %v179
  %815 = vmatpush.bf16.msra.mxu0 %v175
  %816 = vmatpush.bf16.msra.mxu0 %v171
  %817 = vmatpush.bf16.msra.mxu0 %v167
  %818 = vmatpush.bf16.msra.mxu0 %v163
  %819 = vmatpush.bf16.msra.mxu0 %v159
  %820 = vmatmul.bf16.gmra.mxu0 %v765
  %v821 = vpop.f32.mrf.mxu0
  %v822 = vadd.f32 0.0, %v821
  %v823 = vpop.f32.mrf.mxu0
  %824 = vdwg.mxu0
  %v825 = vadd.f32 %v769, %v783
  %v826 = vadd.f32 %v770, %v796
  %v827 = vadd.f32 %v771, %v809
  %v828 = vadd.f32 %v772, %v822
  %v829 = vtanh.pop %v825
  %v830 = vtanh.pop %v826
  %v831 = vtanh.pop %v827
  %v832 = vtanh.pop %v828
  %v833 = vmul.f32 %v829, 0.5
  %v834 = vadd.f32 %v833, 0.5
  %v835 = vmul.f32 %v830, 0.5
  %v836 = vadd.f32 %v835, 0.5
  %v837 = vmul.f32 %v832, 0.5
  %v838 = vadd.f32 %v837, 0.5
  %v839 = vmul.f32 %v836, %v762
  %v840 = vmul.f32 %v834, %v831
  %v841 = vadd.f32 %v839, %v840
  %v842 = vtanh.pop %v841
  %v843 = vmul.f32 %v838, %v842
  %v844 = vpack.c.bf16 %v843, %v843
  %845 = vst [vmem:[%s2] sm:$0xf] %v844
  %846 = vst [vmem:[%s3] sm:$0xff] %v841
  // Predicated region
  $region14: #{encoder_lstm_forward.1} parent=0 // pred_check
    _
  $region15: #{encoder_lstm_forward.1} parent=0 // pred_check_branch
    %848 = sbr.rel (0) target = $region17
  $region16: #{encoder_lstm_forward.1} parent=0 // pred_region
    _
  $region17: #{encoder_lstm_forward.1} parent=0 // pred_fallthru
    _
  // Predicated region
  $region18: #{encoder_lstm_forward.1} parent=0 // pred_check
    _
  $region19: #{encoder_lstm_forward.1} parent=0 // pred_check_branch
    %850 = sbr.rel (0) target = $region21
  $region20: #{encoder_lstm_forward.1} parent=0 // pred_region
    _
  $region21: #{encoder_lstm_forward.1} parent=0 // pred_fallthru
    _
  // Predicated region
  $region22: #{encoder_lstm_forward.1} parent=0 // pred_check
    _
  $region23: #{encoder_lstm_forward.1} parent=0 // pred_check_branch
    %852 = sbr.rel (0) target = $region25
  $region24: #{encoder_lstm_forward.1} parent=0 // pred_region
    _
  $region25: #{encoder_lstm_forward.1} parent=0 // pred_fallthru
    _
  // Predicated region
  $region26: #{encoder_lstm_forward.1} parent=0 // pred_check
    _
  $region27: #{encoder_lstm_forward.1} parent=0 // pred_check_branch
    %854 = sbr.rel (0) target = $region29
  $region28: #{encoder_lstm_forward.1} parent=0 // pred_region
    _
  $region29: #{encoder_lstm_forward.1} parent=0 // pred_fallthru
    _

</llo_original>
